<compile_context>
chip_gen: v5e
topology: v5e:2x2
jax: 0.10.0
libtpu: 0.0.40
codegen_flags: <defaults>
</compile_context>

<pallas_src>
import jax
import jax.numpy as jnp
import numpy as np
from jax.experimental import pallas as pl
from jax.experimental.pallas import tpu as pltpu

LAMBDA_RATE = 0.9
LANE = 128
SUBLANE = 8
ACC_VMEM_BUDGET = 40 * 1024 * 1024   # resident-stack budget per core (fits v7x)
VMEM_LIMIT_CAP = 56 * 1024 * 1024    # stay under v7x's 64 MiB physical VMEM


def all_means_tracker_forward(mean_fields, x, means_idx_0, prop_means_idx_0,
                              *, batch_tile=8, lambda_rate=LAMBDA_RATE,
                              feature_slabs=None):
    """Returns the updated stack of mean fields, same shape/dtype as `mean_fields`."""
    B = x.shape[0]
    nb_mean_fields = mean_fields.shape[0]
    feat_shape = mean_fields.shape[1:]           # (nb_dims, H, W) or (nb_dims, D, H, W)
    assert x.shape[1:] == feat_shape
    assert nb_mean_fields >= 2

    F = int(np.prod(feat_shape))
    # Pad features to full (8, 128) vregs -> every vld/vst is unmasked.
    F_pad = ((F + SUBLANE * LANE - 1) // (SUBLANE * LANE)) * (SUBLANE * LANE)
    R = F_pad // LANE                            # multiple of 8

    # --- feature-slab count: keep resident accumulator under budget; each slab
    # is independent, so the slab grid axis can be "parallel" (2 TCs on v7x).
    r8 = R // SUBLANE
    if feature_slabs is None:
        n_slabs = r8
        for d in range(1, r8 + 1):
            if r8 % d == 0 and nb_mean_fields * (R // d) * LANE * 4 <= ACC_VMEM_BUDGET:
                n_slabs = d
                break
    else:
        n_slabs = int(feature_slabs)
    assert R % n_slabs == 0 and (R // n_slabs) % SUBLANE == 0
    slab_R = R // n_slabs

    BT = int(batch_tile)
    B_pad = ((B + BT - 1) // BT) * BT
    n_blocks = B_pad // BT

    # ---- lane-dense, padded layouts (wrapper-side plumbing only) ----
    # x stays in its native dtype (halves streaming bytes for bf16 inputs).
    x_f = jnp.reshape(x, (B, F))
    x_f = jnp.pad(x_f, ((0, B_pad - B), (0, F_pad - F)))
    x_f = jnp.reshape(x_f, (B_pad, R, LANE))

    # mean-field stack: slab-major so per-slab seed/writeback DMAs are contiguous.
    mf_f = jnp.reshape(mean_fields.astype(jnp.float32), (nb_mean_fields, F))
    mf_f = jnp.pad(mf_f, ((0, 0), (0, F_pad - F)))
    mf_f = jnp.reshape(mf_f, (nb_mean_fields, n_slabs, slab_R, LANE))
    mf_f = jnp.transpose(mf_f, (1, 0, 2, 3))     # (n_slabs, nb, slab_R, LANE)

    idx_pad = jnp.pad(means_idx_0.astype(jnp.int32), (0, B_pad - B))
    prop_pad = jnp.pad(prop_means_idx_0.astype(jnp.float32), (0, B_pad - B))

    one_minus_lam = float(1.0 - lambda_rate)
    unroll = BT if BT <= 8 else 8

    def kernel(idx_ref, prop_ref, x_ref, mf_in_hbm, mf_out_hbm, acc_ref, dma_sem):
        # idx_ref/prop_ref : (B_pad,) SMEM scalar-prefetch
        # x_ref            : (BT, slab_R, LANE) VMEM block (auto-pipelined)
        # mf_in/out_hbm    : (n_slabs, nb, slab_R, LANE) raw HBM refs
        # acc_ref          : (nb, slab_R, LANE) VMEM scratch (resident per slab)
        s = pl.program_id(0)                     # feature slab  ("parallel")
        g = pl.program_id(1)                     # batch block   ("arbitrary")

        # Seed this slab's resident accumulator once, with a single DMA.
        @pl.when(g == 0)
        def _():
            cp = pltpu.make_async_copy(mf_in_hbm.at[s], acc_ref, dma_sem)
            cp.start()
            cp.wait()

        def body(t, carry):
            b = g * BT + t

            # Skip padded batch elements entirely (cold path at runtime).
            @pl.when(b < B)
            def _():
                # Clamp guards against OOB dynamic writes (module precondition:
                # means_idx_0[b] + 1 < nb_mean_fields).
                idx0 = jnp.clip(idx_ref[b], 0, nb_mean_fields - 2)
                p0 = prop_ref[b]
                w0 = p0 * one_minus_lam
                w1 = (1.0 - p0) * one_minus_lam

                xv = x_ref[pl.ds(t, 1)].astype(jnp.float32)   # (1, slab_R, LANE)

                # Two independent single-row RMW chains, scalar-splat weights.
                r0 = acc_ref[pl.ds(idx0, 1)]
                acc_ref[pl.ds(idx0, 1)] = (1.0 - w0) * r0 + w0 * xv
                r1 = acc_ref[pl.ds(idx0 + 1, 1)]
                acc_ref[pl.ds(idx0 + 1, 1)] = (1.0 - w1) * r1 + w1 * xv

            return carry

        # Strictly sequential in the batch (order-dependent updates).
        jax.lax.fori_loop(0, BT, body, 0, unroll=unroll)

        # Write this slab's final state back to HBM once.
        @pl.when(g == pl.num_programs(1) - 1)
        def _():
            cp = pltpu.make_async_copy(acc_ref, mf_out_hbm.at[s], dma_sem)
            cp.start()
            cp.wait()

    grid_spec = pltpu.PrefetchScalarGridSpec(
        num_scalar_prefetch=2,
        grid=(n_slabs, n_blocks),
        in_specs=[
            # x: one (batch block, feature slab) tile per grid step, pipelined.
            pl.BlockSpec((BT, slab_R, LANE),
                         lambda s, g, idx_ref, prop_ref: (g, s, 0)),
            # mean-field stack: raw HBM ref, manual seed/writeback DMAs only.
            pl.BlockSpec(memory_space=pl.ANY),
        ],
        out_specs=pl.BlockSpec(memory_space=pl.ANY),
        scratch_shapes=[
            pltpu.VMEM((nb_mean_fields, slab_R, LANE), jnp.float32),
            pltpu.SemaphoreType.DMA(()),
        ],
    )

    # VMEM limit from actual buffer sizes (+ headroom), capped for v7x.
    x_itemsize = jnp.dtype(x.dtype).itemsize
    acc_bytes = nb_mean_fields * slab_R * LANE * 4
    x_block_bytes = BT * slab_R * LANE * x_itemsize
    vmem_needed = acc_bytes + 2 * x_block_bytes + (2 << 20)
    vmem_limit = int(min(max(vmem_needed, 8 << 20), VMEM_LIMIT_CAP))

    out = pl.pallas_call(
        kernel,
        out_shape=jax.ShapeDtypeStruct((n_slabs, nb_mean_fields, slab_R, LANE),
                                       jnp.float32),
        grid_spec=grid_spec,
        compiler_params=pltpu.CompilerParams(
            # Slabs are independent (megacore-friendly); batch blocks must run
            # sequentially (two elements may touch the same tracker).
            dimension_semantics=("parallel", "arbitrary"),
            vmem_limit_bytes=vmem_limit,
        ),
    )(idx_pad, prop_pad, x_f, mf_f)

    out = jnp.transpose(out, (1, 0, 2, 3))       # (nb, n_slabs, slab_R, LANE)
    out = jnp.reshape(out, (nb_mean_fields, F_pad))[:, :F]
    return jnp.reshape(out, (nb_mean_fields,) + feat_shape).astype(mean_fields.dtype)


def _reference_forward(mean_fields, x, means_idx_0, prop_means_idx_0,
                       lambda_rate=LAMBDA_RATE):
    mf = np.array(mean_fields, dtype=np.float32).copy()
    xs = np.array(x, dtype=np.float32)
    idxs = np.array(means_idx_0)
    props = np.array(prop_means_idx_0, dtype=np.float32)
    for i in range(xs.shape[0]):
        i0 = int(idxs[i])
        p0 = float(props[i])
        for tidx, p in ((i0, p0), (i0 + 1, 1.0 - p0)):
            w = p * (1.0 - lambda_rate)
            mf[tidx] = (1.0 - w) * mf[tidx] + w * xs[i]
    return mf


if __name__ == "__main__":
    key = jax.random.PRNGKey(0)
    k1, k2, k3, k4 = jax.random.split(key, 4)

    # --- Case 1: module-consistent small shapes (single batch block) ---
    B, nb_dims, H, W, nb_mf = 2, 2, 16, 16, 4
    x = jax.random.normal(k1, (B, nb_dims, H, W), dtype=jnp.float32)
    # Nonzero running state so the initial-state read path is exercised.
    mean_fields = 0.1 * jax.random.normal(k2, (nb_mf, nb_dims, H, W), dtype=jnp.float32)
    means_idx_0 = jnp.array([0, 1], dtype=jnp.int32)       # both touch tracker 1
    prop_means_idx_0 = jnp.array([0.3, 0.75], dtype=jnp.float32)

    out = all_means_tracker_forward(mean_fields, x, means_idx_0, prop_means_idx_0)
    out = jax.block_until_ready(out)
    ref = _reference_forward(mean_fields, x, means_idx_0, prop_means_idx_0)
    np.testing.assert_allclose(np.array(out), ref, rtol=1e-5, atol=1e-5)

    # --- Case 2: B > batch_tile (multi-block), ragged feature dim (padding),
    #             colliding tracker indices across blocks (cross-block order) ---
    B2, H2, W2, nb_mf2 = 13, 12, 12, 5
    x2 = jax.random.normal(k3, (B2, nb_dims, H2, W2), dtype=jnp.float32)
    mf2 = 0.2 * jax.random.normal(k4, (nb_mf2, nb_dims, H2, W2), dtype=jnp.float32)
    means_idx_2 = jnp.array([0, 1, 2, 3, 0, 1, 2, 3, 1, 1, 2, 0, 3], dtype=jnp.int32)
    prop_2 = jnp.linspace(0.05, 0.95, B2).astype(jnp.float32)

    out2 = all_means_tracker_forward(mf2, x2, means_idx_2, prop_2, batch_tile=4)
    out2 = jax.block_until_ready(out2)
    ref2 = _reference_forward(mf2, x2, means_idx_2, prop_2)
    np.testing.assert_allclose(np.array(out2), ref2, rtol=1e-5, atol=1e-5)

    print("KERNEL_OK")
</pallas_src>

<mosaic_0001>
module attributes {stable_mosaic.version = 11 : i64} {
  func.func @kernel(%arg0: i32, %arg1: i32, %arg2: memref<8xi32, #tpu.memory_space<smem>>, %arg3: memref<8xf32, #tpu.memory_space<smem>>, %arg4: memref<8x8x128xf32, #tpu.memory_space<vmem>>, %arg5: memref<1x4x8x128xf32, #tpu.memory_space<any>>, %arg6: memref<1x4x8x128xf32, #tpu.memory_space<any>>, %arg7: memref<4x8x128xf32, #tpu.memory_space<vmem>>, %arg8: memref<!tpu.dma_semaphore, #tpu.memory_space<semaphore_mem>>) attributes {dimension_semantics = [#tpu.dimension_semantics<parallel>, #tpu.dimension_semantics<arbitrary>], iteration_bounds = array<i64: 1, 1>, scalar_prefetch = 2 : i64, scratch_operands = 2 : i64, tpu.core_type = #tpu.core_type<tc>, window_params = [{transform_indices = @transform_0, window_bounds = array<i64: 8, 8, 128>}, {}, {}]} {
    %c0_i32 = arith.constant 0 : i32
    %0 = arith.cmpi eq, %arg1, %c0_i32 : i32
    %1 = arith.extui %0 : i1 to i32
    %c0_i32_0 = arith.constant 0 : i32
    %2 = arith.cmpi ne, %1, %c0_i32_0 : i32
    scf.if %2 {
      %c0_i32_28 = arith.constant 0 : i32
      %c0_i32_29 = arith.constant 0 : i32
      %c0_i32_30 = arith.constant 0 : i32
      %46 = tpu.memref_slice %arg5[%arg0, %c0_i32_28, %c0_i32_29, %c0_i32_30] : memref<1x4x8x128xf32, #tpu.memory_space<any>> -> memref<1x4x8x128xf32, #tpu.memory_space<any>>
      %47 = tpu.memref_squeeze %46 : memref<1x4x8x128xf32, #tpu.memory_space<any>> -> memref<4x8x128xf32, #tpu.memory_space<any>>
      tpu.enqueue_dma source(%47 : memref<4x8x128xf32, #tpu.memory_space<any>>) target(%arg7 : memref<4x8x128xf32, #tpu.memory_space<vmem>>) target_semaphore(%arg8 : memref<!tpu.dma_semaphore, #tpu.memory_space<semaphore_mem>>)
      %c0_i32_31 = arith.constant 0 : i32
      %c0_i32_32 = arith.constant 0 : i32
      %c0_i32_33 = arith.constant 0 : i32
      %48 = tpu.memref_slice %arg5[%arg0, %c0_i32_31, %c0_i32_32, %c0_i32_33] : memref<1x4x8x128xf32, #tpu.memory_space<any>> -> memref<1x4x8x128xf32, #tpu.memory_space<any>>
      %49 = tpu.memref_squeeze %48 : memref<1x4x8x128xf32, #tpu.memory_space<any>> -> memref<4x8x128xf32, #tpu.memory_space<any>>
      tpu.wait_dma2 semaphore(%arg8 : memref<!tpu.dma_semaphore, #tpu.memory_space<semaphore_mem>>) src(%49 : memref<4x8x128xf32, #tpu.memory_space<any>>) dst(%arg7 : memref<4x8x128xf32, #tpu.memory_space<vmem>>)
    } else {
    }
    %c0_i32_1 = arith.constant 0 : i32
    %c8_i32 = arith.constant 8 : i32
    %3 = arith.muli %arg1, %c8_i32 : i32
    %4 = arith.addi %3, %c0_i32_1 : i32
    %c2_i32 = arith.constant 2 : i32
    %5 = arith.cmpi slt, %4, %c2_i32 : i32
    %6 = arith.extui %5 : i1 to i32
    %c0_i32_2 = arith.constant 0 : i32
    %7 = arith.cmpi ne, %6, %c0_i32_2 : i32
    scf.if %7 {
      %46 = arith.index_cast %4 : i32 to index
      %47 = memref.load %arg2[%46] : memref<8xi32, #tpu.memory_space<smem>>
      %c0_i32_28 = arith.constant 0 : i32
      %c2_i32_29 = arith.constant 2 : i32
      %48 = arith.maxsi %c0_i32_28, %47 : i32
      %49 = arith.minsi %c2_i32_29, %48 : i32
      %50 = arith.index_cast %4 : i32 to index
      %51 = memref.load %arg3[%50] : memref<8xf32, #tpu.memory_space<smem>>
      %cst = arith.constant 1.000000e-01 : f32
      %52 = arith.mulf %51, %cst : f32
      %cst_30 = arith.constant 1.000000e+00 : f32
      %53 = arith.subf %cst_30, %51 : f32
      %cst_31 = arith.constant 1.000000e-01 : f32
      %54 = arith.mulf %53, %cst_31 : f32
      %55 = arith.index_cast %c0_i32_1 : i32 to index
      %c0 = arith.constant 0 : index
      %c0_32 = arith.constant 0 : index
      %56 = vector.load %arg4[%55, %c0, %c0_32] : memref<8x8x128xf32, #tpu.memory_space<vmem>>, vector<1x8x128xf32>
      %57 = arith.index_cast %49 : i32 to index
      %c0_33 = arith.constant 0 : index
      %c0_34 = arith.constant 0 : index
      %58 = vector.load %arg7[%57, %c0_33, %c0_34] : memref<4x8x128xf32, #tpu.memory_space<vmem>>, vector<1x8x128xf32>
      %cst_35 = arith.constant 1.000000e+00 : f32
      %59 = arith.subf %cst_35, %52 : f32
      %60 = vector.broadcast %59 : f32 to vector<1x8x128xf32>
      %61 = arith.mulf %60, %58 : vector<1x8x128xf32>
      %62 = vector.broadcast %52 : f32 to vector<1x8x128xf32>
      %63 = arith.mulf %62, %56 : vector<1x8x128xf32>
      %64 = arith.addf %61, %63 : vector<1x8x128xf32>
      %65 = arith.index_cast %49 : i32 to index
      %c0_36 = arith.constant 0 : index
      %c0_37 = arith.constant 0 : index
      %66 = vector.load %arg7[%65, %c0_36, %c0_37] : memref<4x8x128xf32, #tpu.memory_space<vmem>>, vector<1x8x128xf32>
      tpu.vector_store %arg7[%65, %c0_36, %c0_37], %64 {strides = array<i32>} : memref<4x8x128xf32, #tpu.memory_space<vmem>>, vector<1x8x128xf32>,
      %c1_i32_38 = arith.constant 1 : i32
      %67 = arith.addi %49, %c1_i32_38 : i32
      %68 = arith.index_cast %67 : i32 to index
      %c0_39 = arith.constant 0 : index
      %c0_40 = arith.constant 0 : index
      %69 = vector.load %arg7[%68, %c0_39, %c0_40] : memref<4x8x128xf32, #tpu.memory_space<vmem>>, vector<1x8x128xf32>
      %cst_41 = arith.constant 1.000000e+00 : f32
      %70 = arith.subf %cst_41, %54 : f32
      %71 = vector.broadcast %70 : f32 to vector<1x8x128xf32>
      %72 = arith.mulf %71, %69 : vector<1x8x128xf32>
      %73 = vector.broadcast %54 : f32 to vector<1x8x128xf32>
      %74 = arith.mulf %73, %56 : vector<1x8x128xf32>
      %75 = arith.addf %72, %74 : vector<1x8x128xf32>
      %c1_i32_42 = arith.constant 1 : i32
      %76 = arith.addi %49, %c1_i32_42 : i32
      %77 = arith.index_cast %76 : i32 to index
      %c0_43 = arith.constant 0 : index
      %c0_44 = arith.constant 0 : index
      %78 = vector.load %arg7[%77, %c0_43, %c0_44] : memref<4x8x128xf32, #tpu.memory_space<vmem>>, vector<1x8x128xf32>
      tpu.vector_store %arg7[%77, %c0_43, %c0_44], %75 {strides = array<i32>} : memref<4x8x128xf32, #tpu.memory_space<vmem>>, vector<1x8x128xf32>,
    } else {
    }
    %c1_i32 = arith.constant 1 : i32
    %c8_i32_3 = arith.constant 8 : i32
    %8 = arith.muli %arg1, %c8_i32_3 : i32
    %9 = arith.addi %8, %c1_i32 : i32
    %c2_i32_4 = arith.constant 2 : i32
    %10 = arith.cmpi slt, %9, %c2_i32_4 : i32
    %11 = arith.extui %10 : i1 to i32
    %c0_i32_5 = arith.constant 0 : i32
    %12 = arith.cmpi ne, %11, %c0_i32_5 : i32
    scf.if %12 {
      %46 = arith.index_cast %9 : i32 to index
      %47 = memref.load %arg2[%46] : memref<8xi32, #tpu.memory_space<smem>>
      %c0_i32_28 = arith.constant 0 : i32
      %c2_i32_29 = arith.constant 2 : i32
      %48 = arith.maxsi %c0_i32_28, %47 : i32
      %49 = arith.minsi %c2_i32_29, %48 : i32
      %50 = arith.index_cast %9 : i32 to index
      %51 = memref.load %arg3[%50] : memref<8xf32, #tpu.memory_space<smem>>
      %cst = arith.constant 1.000000e-01 : f32
      %52 = arith.mulf %51, %cst : f32
      %cst_30 = arith.constant 1.000000e+00 : f32
      %53 = arith.subf %cst_30, %51 : f32
      %cst_31 = arith.constant 1.000000e-01 : f32
      %54 = arith.mulf %53, %cst_31 : f32
      %55 = arith.index_cast %c1_i32 : i32 to index
      %c0 = arith.constant 0 : index
      %c0_32 = arith.constant 0 : index
      %56 = vector.load %arg4[%55, %c0, %c0_32] : memref<8x8x128xf32, #tpu.memory_space<vmem>>, vector<1x8x128xf32>
      %57 = arith.index_cast %49 : i32 to index
      %c0_33 = arith.constant 0 : index
      %c0_34 = arith.constant 0 : index
      %58 = vector.load %arg7[%57, %c0_33, %c0_34] : memref<4x8x128xf32, #tpu.memory_space<vmem>>, vector<1x8x128xf32>
      %cst_35 = arith.constant 1.000000e+00 : f32
      %59 = arith.subf %cst_35, %52 : f32
      %60 = vector.broadcast %59 : f32 to vector<1x8x128xf32>
      %61 = arith.mulf %60, %58 : vector<1x8x128xf32>
      %62 = vector.broadcast %52 : f32 to vector<1x8x128xf32>
      %63 = arith.mulf %62, %56 : vector<1x8x128xf32>
      %64 = arith.addf %61, %63 : vector<1x8x128xf32>
      %65 = arith.index_cast %49 : i32 to index
      %c0_36 = arith.constant 0 : index
      %c0_37 = arith.constant 0 : index
      %66 = vector.load %arg7[%65, %c0_36, %c0_37] : memref<4x8x128xf32, #tpu.memory_space<vmem>>, vector<1x8x128xf32>
      tpu.vector_store %arg7[%65, %c0_36, %c0_37], %64 {strides = array<i32>} : memref<4x8x128xf32, #tpu.memory_space<vmem>>, vector<1x8x128xf32>,
      %c1_i32_38 = arith.constant 1 : i32
      %67 = arith.addi %49, %c1_i32_38 : i32
      %68 = arith.index_cast %67 : i32 to index
      %c0_39 = arith.constant 0 : index
      %c0_40 = arith.constant 0 : index
      %69 = vector.load %arg7[%68, %c0_39, %c0_40] : memref<4x8x128xf32, #tpu.memory_space<vmem>>, vector<1x8x128xf32>
      %cst_41 = arith.constant 1.000000e+00 : f32
      %70 = arith.subf %cst_41, %54 : f32
      %71 = vector.broadcast %70 : f32 to vector<1x8x128xf32>
      %72 = arith.mulf %71, %69 : vector<1x8x128xf32>
      %73 = vector.broadcast %54 : f32 to vector<1x8x128xf32>
      %74 = arith.mulf %73, %56 : vector<1x8x128xf32>
      %75 = arith.addf %72, %74 : vector<1x8x128xf32>
      %c1_i32_42 = arith.constant 1 : i32
      %76 = arith.addi %49, %c1_i32_42 : i32
      %77 = arith.index_cast %76 : i32 to index
      %c0_43 = arith.constant 0 : index
      %c0_44 = arith.constant 0 : index
      %78 = vector.load %arg7[%77, %c0_43, %c0_44] : memref<4x8x128xf32, #tpu.memory_space<vmem>>, vector<1x8x128xf32>
      tpu.vector_store %arg7[%77, %c0_43, %c0_44], %75 {strides = array<i32>} : memref<4x8x128xf32, #tpu.memory_space<vmem>>, vector<1x8x128xf32>,
    } else {
    }
    %c2_i32_6 = arith.constant 2 : i32
    %c8_i32_7 = arith.constant 8 : i32
    %13 = arith.muli %arg1, %c8_i32_7 : i32
    %14 = arith.addi %13, %c2_i32_6 : i32
    %c2_i32_8 = arith.constant 2 : i32
    %15 = arith.cmpi slt, %14, %c2_i32_8 : i32
    %16 = arith.extui %15 : i1 to i32
    %c0_i32_9 = arith.constant 0 : i32
    %17 = arith.cmpi ne, %16, %c0_i32_9 : i32
    scf.if %17 {
      %46 = arith.index_cast %14 : i32 to index
      %47 = memref.load %arg2[%46] : memref<8xi32, #tpu.memory_space<smem>>
      %c0_i32_28 = arith.constant 0 : i32
      %c2_i32_29 = arith.constant 2 : i32
      %48 = arith.maxsi %c0_i32_28, %47 : i32
      %49 = arith.minsi %c2_i32_29, %48 : i32
      %50 = arith.index_cast %14 : i32 to index
      %51 = memref.load %arg3[%50] : memref<8xf32, #tpu.memory_space<smem>>
      %cst = arith.constant 1.000000e-01 : f32
      %52 = arith.mulf %51, %cst : f32
      %cst_30 = arith.constant 1.000000e+00 : f32
      %53 = arith.subf %cst_30, %51 : f32
      %cst_31 = arith.constant 1.000000e-01 : f32
      %54 = arith.mulf %53, %cst_31 : f32
      %55 = arith.index_cast %c2_i32_6 : i32 to index
      %c0 = arith.constant 0 : index
      %c0_32 = arith.constant 0 : index
      %56 = vector.load %arg4[%55, %c0, %c0_32] : memref<8x8x128xf32, #tpu.memory_space<vmem>>, vector<1x8x128xf32>
      %57 = arith.index_cast %49 : i32 to index
      %c0_33 = arith.constant 0 : index
      %c0_34 = arith.constant 0 : index
      %58 = vector.load %arg7[%57, %c0_33, %c0_34] : memref<4x8x128xf32, #tpu.memory_space<vmem>>, vector<1x8x128xf32>
      %cst_35 = arith.constant 1.000000e+00 : f32
      %59 = arith.subf %cst_35, %52 : f32
      %60 = vector.broadcast %59 : f32 to vector<1x8x128xf32>
      %61 = arith.mulf %60, %58 : vector<1x8x128xf32>
      %62 = vector.broadcast %52 : f32 to vector<1x8x128xf32>
      %63 = arith.mulf %62, %56 : vector<1x8x128xf32>
      %64 = arith.addf %61, %63 : vector<1x8x128xf32>
      %65 = arith.index_cast %49 : i32 to index
      %c0_36 = arith.constant 0 : index
      %c0_37 = arith.constant 0 : index
      %66 = vector.load %arg7[%65, %c0_36, %c0_37] : memref<4x8x128xf32, #tpu.memory_space<vmem>>, vector<1x8x128xf32>
      tpu.vector_store %arg7[%65, %c0_36, %c0_37], %64 {strides = array<i32>} : memref<4x8x128xf32, #tpu.memory_space<vmem>>, vector<1x8x128xf32>,
      %c1_i32_38 = arith.constant 1 : i32
      %67 = arith.addi %49, %c1_i32_38 : i32
      %68 = arith.index_cast %67 : i32 to index
      %c0_39 = arith.constant 0 : index
      %c0_40 = arith.constant 0 : index
      %69 = vector.load %arg7[%68, %c0_39, %c0_40] : memref<4x8x128xf32, #tpu.memory_space<vmem>>, vector<1x8x128xf32>
      %cst_41 = arith.constant 1.000000e+00 : f32
      %70 = arith.subf %cst_41, %54 : f32
      %71 = vector.broadcast %70 : f32 to vector<1x8x128xf32>
      %72 = arith.mulf %71, %69 : vector<1x8x128xf32>
      %73 = vector.broadcast %54 : f32 to vector<1x8x128xf32>
      %74 = arith.mulf %73, %56 : vector<1x8x128xf32>
      %75 = arith.addf %72, %74 : vector<1x8x128xf32>
      %c1_i32_42 = arith.constant 1 : i32
      %76 = arith.addi %49, %c1_i32_42 : i32
      %77 = arith.index_cast %76 : i32 to index
      %c0_43 = arith.constant 0 : index
      %c0_44 = arith.constant 0 : index
      %78 = vector.load %arg7[%77, %c0_43, %c0_44] : memref<4x8x128xf32, #tpu.memory_space<vmem>>, vector<1x8x128xf32>
      tpu.vector_store %arg7[%77, %c0_43, %c0_44], %75 {strides = array<i32>} : memref<4x8x128xf32, #tpu.memory_space<vmem>>, vector<1x8x128xf32>,
    } else {
    }
    %c3_i32 = arith.constant 3 : i32
    %c8_i32_10 = arith.constant 8 : i32
    %18 = arith.muli %arg1, %c8_i32_10 : i32
    %19 = arith.addi %18, %c3_i32 : i32
    %c2_i32_11 = arith.constant 2 : i32
    %20 = arith.cmpi slt, %19, %c2_i32_11 : i32
    %21 = arith.extui %20 : i1 to i32
    %c0_i32_12 = arith.constant 0 : i32
    %22 = arith.cmpi ne, %21, %c0_i32_12 : i32
    scf.if %22 {
      %46 = arith.index_cast %19 : i32 to index
      %47 = memref.load %arg2[%46] : memref<8xi32, #tpu.memory_space<smem>>
      %c0_i32_28 = arith.constant 0 : i32
      %c2_i32_29 = arith.constant 2 : i32
      %48 = arith.maxsi %c0_i32_28, %47 : i32
      %49 = arith.minsi %c2_i32_29, %48 : i32
      %50 = arith.index_cast %19 : i32 to index
      %51 = memref.load %arg3[%50] : memref<8xf32, #tpu.memory_space<smem>>
      %cst = arith.constant 1.000000e-01 : f32
      %52 = arith.mulf %51, %cst : f32
      %cst_30 = arith.constant 1.000000e+00 : f32
      %53 = arith.subf %cst_30, %51 : f32
      %cst_31 = arith.constant 1.000000e-01 : f32
      %54 = arith.mulf %53, %cst_31 : f32
      %55 = arith.index_cast %c3_i32 : i32 to index
      %c0 = arith.constant 0 : index
      %c0_32 = arith.constant 0 : index
      %56 = vector.load %arg4[%55, %c0, %c0_32] : memref<8x8x128xf32, #tpu.memory_space<vmem>>, vector<1x8x128xf32>
      %57 = arith.index_cast %49 : i32 to index
      %c0_33 = arith.constant 0 : index
      %c0_34 = arith.constant 0 : index
      %58 = vector.load %arg7[%57, %c0_33, %c0_34] : memref<4x8x128xf32, #tpu.memory_space<vmem>>, vector<1x8x128xf32>
      %cst_35 = arith.constant 1.000000e+00 : f32
      %59 = arith.subf %cst_35, %52 : f32
      %60 = vector.broadcast %59 : f32 to vector<1x8x128xf32>
      %61 = arith.mulf %60, %58 : vector<1x8x128xf32>
      %62 = vector.broadcast %52 : f32 to vector<1x8x128xf32>
      %63 = arith.mulf %62, %56 : vector<1x8x128xf32>
      %64 = arith.addf %61, %63 : vector<1x8x128xf32>
      %65 = arith.index_cast %49 : i32 to index
      %c0_36 = arith.constant 0 : index
      %c0_37 = arith.constant 0 : index
      %66 = vector.load %arg7[%65, %c0_36, %c0_37] : memref<4x8x128xf32, #tpu.memory_space<vmem>>, vector<1x8x128xf32>
      tpu.vector_store %arg7[%65, %c0_36, %c0_37], %64 {strides = array<i32>} : memref<4x8x128xf32, #tpu.memory_space<vmem>>, vector<1x8x128xf32>,
      %c1_i32_38 = arith.constant 1 : i32
      %67 = arith.addi %49, %c1_i32_38 : i32
      %68 = arith.index_cast %67 : i32 to index
      %c0_39 = arith.constant 0 : index
      %c0_40 = arith.constant 0 : index
      %69 = vector.load %arg7[%68, %c0_39, %c0_40] : memref<4x8x128xf32, #tpu.memory_space<vmem>>, vector<1x8x128xf32>
      %cst_41 = arith.constant 1.000000e+00 : f32
      %70 = arith.subf %cst_41, %54 : f32
      %71 = vector.broadcast %70 : f32 to vector<1x8x128xf32>
      %72 = arith.mulf %71, %69 : vector<1x8x128xf32>
      %73 = vector.broadcast %54 : f32 to vector<1x8x128xf32>
      %74 = arith.mulf %73, %56 : vector<1x8x128xf32>
      %75 = arith.addf %72, %74 : vector<1x8x128xf32>
      %c1_i32_42 = arith.constant 1 : i32
      %76 = arith.addi %49, %c1_i32_42 : i32
      %77 = arith.index_cast %76 : i32 to index
      %c0_43 = arith.constant 0 : index
      %c0_44 = arith.constant 0 : index
      %78 = vector.load %arg7[%77, %c0_43, %c0_44] : memref<4x8x128xf32, #tpu.memory_space<vmem>>, vector<1x8x128xf32>
      tpu.vector_store %arg7[%77, %c0_43, %c0_44], %75 {strides = array<i32>} : memref<4x8x128xf32, #tpu.memory_space<vmem>>, vector<1x8x128xf32>,
    } else {
    }
    %c4_i32 = arith.constant 4 : i32
    %c8_i32_13 = arith.constant 8 : i32
    %23 = arith.muli %arg1, %c8_i32_13 : i32
    %24 = arith.addi %23, %c4_i32 : i32
    %c2_i32_14 = arith.constant 2 : i32
    %25 = arith.cmpi slt, %24, %c2_i32_14 : i32
    %26 = arith.extui %25 : i1 to i32
    %c0_i32_15 = arith.constant 0 : i32
    %27 = arith.cmpi ne, %26, %c0_i32_15 : i32
    scf.if %27 {
      %46 = arith.index_cast %24 : i32 to index
      %47 = memref.load %arg2[%46] : memref<8xi32, #tpu.memory_space<smem>>
      %c0_i32_28 = arith.constant 0 : i32
      %c2_i32_29 = arith.constant 2 : i32
      %48 = arith.maxsi %c0_i32_28, %47 : i32
      %49 = arith.minsi %c2_i32_29, %48 : i32
      %50 = arith.index_cast %24 : i32 to index
      %51 = memref.load %arg3[%50] : memref<8xf32, #tpu.memory_space<smem>>
      %cst = arith.constant 1.000000e-01 : f32
      %52 = arith.mulf %51, %cst : f32
      %cst_30 = arith.constant 1.000000e+00 : f32
      %53 = arith.subf %cst_30, %51 : f32
      %cst_31 = arith.constant 1.000000e-01 : f32
      %54 = arith.mulf %53, %cst_31 : f32
      %55 = arith.index_cast %c4_i32 : i32 to index
      %c0 = arith.constant 0 : index
      %c0_32 = arith.constant 0 : index
      %56 = vector.load %arg4[%55, %c0, %c0_32] : memref<8x8x128xf32, #tpu.memory_space<vmem>>, vector<1x8x128xf32>
      %57 = arith.index_cast %49 : i32 to index
      %c0_33 = arith.constant 0 : index
      %c0_34 = arith.constant 0 : index
      %58 = vector.load %arg7[%57, %c0_33, %c0_34] : memref<4x8x128xf32, #tpu.memory_space<vmem>>, vector<1x8x128xf32>
      %cst_35 = arith.constant 1.000000e+00 : f32
      %59 = arith.subf %cst_35, %52 : f32
      %60 = vector.broadcast %59 : f32 to vector<1x8x128xf32>
      %61 = arith.mulf %60, %58 : vector<1x8x128xf32>
      %62 = vector.broadcast %52 : f32 to vector<1x8x128xf32>
      %63 = arith.mulf %62, %56 : vector<1x8x128xf32>
      %64 = arith.addf %61, %63 : vector<1x8x128xf32>
      %65 = arith.index_cast %49 : i32 to index
      %c0_36 = arith.constant 0 : index
      %c0_37 = arith.constant 0 : index
      %66 = vector.load %arg7[%65, %c0_36, %c0_37] : memref<4x8x128xf32, #tpu.memory_space<vmem>>, vector<1x8x128xf32>
      tpu.vector_store %arg7[%65, %c0_36, %c0_37], %64 {strides = array<i32>} : memref<4x8x128xf32, #tpu.memory_space<vmem>>, vector<1x8x128xf32>,
      %c1_i32_38 = arith.constant 1 : i32
      %67 = arith.addi %49, %c1_i32_38 : i32
      %68 = arith.index_cast %67 : i32 to index
      %c0_39 = arith.constant 0 : index
      %c0_40 = arith.constant 0 : index
      %69 = vector.load %arg7[%68, %c0_39, %c0_40] : memref<4x8x128xf32, #tpu.memory_space<vmem>>, vector<1x8x128xf32>
      %cst_41 = arith.constant 1.000000e+00 : f32
      %70 = arith.subf %cst_41, %54 : f32
      %71 = vector.broadcast %70 : f32 to vector<1x8x128xf32>
      %72 = arith.mulf %71, %69 : vector<1x8x128xf32>
      %73 = vector.broadcast %54 : f32 to vector<1x8x128xf32>
      %74 = arith.mulf %73, %56 : vector<1x8x128xf32>
      %75 = arith.addf %72, %74 : vector<1x8x128xf32>
      %c1_i32_42 = arith.constant 1 : i32
      %76 = arith.addi %49, %c1_i32_42 : i32
      %77 = arith.index_cast %76 : i32 to index
      %c0_43 = arith.constant 0 : index
      %c0_44 = arith.constant 0 : index
      %78 = vector.load %arg7[%77, %c0_43, %c0_44] : memref<4x8x128xf32, #tpu.memory_space<vmem>>, vector<1x8x128xf32>
      tpu.vector_store %arg7[%77, %c0_43, %c0_44], %75 {strides = array<i32>} : memref<4x8x128xf32, #tpu.memory_space<vmem>>, vector<1x8x128xf32>,
    } else {
    }
    %c5_i32 = arith.constant 5 : i32
    %c8_i32_16 = arith.constant 8 : i32
    %28 = arith.muli %arg1, %c8_i32_16 : i32
    %29 = arith.addi %28, %c5_i32 : i32
    %c2_i32_17 = arith.constant 2 : i32
    %30 = arith.cmpi slt, %29, %c2_i32_17 : i32
    %31 = arith.extui %30 : i1 to i32
    %c0_i32_18 = arith.constant 0 : i32
    %32 = arith.cmpi ne, %31, %c0_i32_18 : i32
    scf.if %32 {
      %46 = arith.index_cast %29 : i32 to index
      %47 = memref.load %arg2[%46] : memref<8xi32, #tpu.memory_space<smem>>
      %c0_i32_28 = arith.constant 0 : i32
      %c2_i32_29 = arith.constant 2 : i32
      %48 = arith.maxsi %c0_i32_28, %47 : i32
      %49 = arith.minsi %c2_i32_29, %48 : i32
      %50 = arith.index_cast %29 : i32 to index
      %51 = memref.load %arg3[%50] : memref<8xf32, #tpu.memory_space<smem>>
      %cst = arith.constant 1.000000e-01 : f32
      %52 = arith.mulf %51, %cst : f32
      %cst_30 = arith.constant 1.000000e+00 : f32
      %53 = arith.subf %cst_30, %51 : f32
      %cst_31 = arith.constant 1.000000e-01 : f32
      %54 = arith.mulf %53, %cst_31 : f32
      %55 = arith.index_cast %c5_i32 : i32 to index
      %c0 = arith.constant 0 : index
      %c0_32 = arith.constant 0 : index
      %56 = vector.load %arg4[%55, %c0, %c0_32] : memref<8x8x128xf32, #tpu.memory_space<vmem>>, vector<1x8x128xf32>
      %57 = arith.index_cast %49 : i32 to index
      %c0_33 = arith.constant 0 : index
      %c0_34 = arith.constant 0 : index
      %58 = vector.load %arg7[%57, %c0_33, %c0_34] : memref<4x8x128xf32, #tpu.memory_space<vmem>>, vector<1x8x128xf32>
      %cst_35 = arith.constant 1.000000e+00 : f32
      %59 = arith.subf %cst_35, %52 : f32
      %60 = vector.broadcast %59 : f32 to vector<1x8x128xf32>
      %61 = arith.mulf %60, %58 : vector<1x8x128xf32>
      %62 = vector.broadcast %52 : f32 to vector<1x8x128xf32>
      %63 = arith.mulf %62, %56 : vector<1x8x128xf32>
      %64 = arith.addf %61, %63 : vector<1x8x128xf32>
      %65 = arith.index_cast %49 : i32 to index
      %c0_36 = arith.constant 0 : index
      %c0_37 = arith.constant 0 : index
      %66 = vector.load %arg7[%65, %c0_36, %c0_37] : memref<4x8x128xf32, #tpu.memory_space<vmem>>, vector<1x8x128xf32>
      tpu.vector_store %arg7[%65, %c0_36, %c0_37], %64 {strides = array<i32>} : memref<4x8x128xf32, #tpu.memory_space<vmem>>, vector<1x8x128xf32>,
      %c1_i32_38 = arith.constant 1 : i32
      %67 = arith.addi %49, %c1_i32_38 : i32
      %68 = arith.index_cast %67 : i32 to index
      %c0_39 = arith.constant 0 : index
      %c0_40 = arith.constant 0 : index
      %69 = vector.load %arg7[%68, %c0_39, %c0_40] : memref<4x8x128xf32, #tpu.memory_space<vmem>>, vector<1x8x128xf32>
      %cst_41 = arith.constant 1.000000e+00 : f32
      %70 = arith.subf %cst_41, %54 : f32
      %71 = vector.broadcast %70 : f32 to vector<1x8x128xf32>
      %72 = arith.mulf %71, %69 : vector<1x8x128xf32>
      %73 = vector.broadcast %54 : f32 to vector<1x8x128xf32>
      %74 = arith.mulf %73, %56 : vector<1x8x128xf32>
      %75 = arith.addf %72, %74 : vector<1x8x128xf32>
      %c1_i32_42 = arith.constant 1 : i32
      %76 = arith.addi %49, %c1_i32_42 : i32
      %77 = arith.index_cast %76 : i32 to index
      %c0_43 = arith.constant 0 : index
      %c0_44 = arith.constant 0 : index
      %78 = vector.load %arg7[%77, %c0_43, %c0_44] : memref<4x8x128xf32, #tpu.memory_space<vmem>>, vector<1x8x128xf32>
      tpu.vector_store %arg7[%77, %c0_43, %c0_44], %75 {strides = array<i32>} : memref<4x8x128xf32, #tpu.memory_space<vmem>>, vector<1x8x128xf32>,
    } else {
    }
    %c6_i32 = arith.constant 6 : i32
    %c8_i32_19 = arith.constant 8 : i32
    %33 = arith.muli %arg1, %c8_i32_19 : i32
    %34 = arith.addi %33, %c6_i32 : i32
    %c2_i32_20 = arith.constant 2 : i32
    %35 = arith.cmpi slt, %34, %c2_i32_20 : i32
    %36 = arith.extui %35 : i1 to i32
    %c0_i32_21 = arith.constant 0 : i32
    %37 = arith.cmpi ne, %36, %c0_i32_21 : i32
    scf.if %37 {
      %46 = arith.index_cast %34 : i32 to index
      %47 = memref.load %arg2[%46] : memref<8xi32, #tpu.memory_space<smem>>
      %c0_i32_28 = arith.constant 0 : i32
      %c2_i32_29 = arith.constant 2 : i32
      %48 = arith.maxsi %c0_i32_28, %47 : i32
      %49 = arith.minsi %c2_i32_29, %48 : i32
      %50 = arith.index_cast %34 : i32 to index
      %51 = memref.load %arg3[%50] : memref<8xf32, #tpu.memory_space<smem>>
      %cst = arith.constant 1.000000e-01 : f32
      %52 = arith.mulf %51, %cst : f32
      %cst_30 = arith.constant 1.000000e+00 : f32
      %53 = arith.subf %cst_30, %51 : f32
      %cst_31 = arith.constant 1.000000e-01 : f32
      %54 = arith.mulf %53, %cst_31 : f32
      %55 = arith.index_cast %c6_i32 : i32 to index
      %c0 = arith.constant 0 : index
      %c0_32 = arith.constant 0 : index
      %56 = vector.load %arg4[%55, %c0, %c0_32] : memref<8x8x128xf32, #tpu.memory_space<vmem>>, vector<1x8x128xf32>
      %57 = arith.index_cast %49 : i32 to index
      %c0_33 = arith.constant 0 : index
      %c0_34 = arith.constant 0 : index
      %58 = vector.load %arg7[%57, %c0_33, %c0_34] : memref<4x8x128xf32, #tpu.memory_space<vmem>>, vector<1x8x128xf32>
      %cst_35 = arith.constant 1.000000e+00 : f32
      %59 = arith.subf %cst_35, %52 : f32
      %60 = vector.broadcast %59 : f32 to vector<1x8x128xf32>
      %61 = arith.mulf %60, %58 : vector<1x8x128xf32>
      %62 = vector.broadcast %52 : f32 to vector<1x8x128xf32>
      %63 = arith.mulf %62, %56 : vector<1x8x128xf32>
      %64 = arith.addf %61, %63 : vector<1x8x128xf32>
      %65 = arith.index_cast %49 : i32 to index
      %c0_36 = arith.constant 0 : index
      %c0_37 = arith.constant 0 : index
      %66 = vector.load %arg7[%65, %c0_36, %c0_37] : memref<4x8x128xf32, #tpu.memory_space<vmem>>, vector<1x8x128xf32>
      tpu.vector_store %arg7[%65, %c0_36, %c0_37], %64 {strides = array<i32>} : memref<4x8x128xf32, #tpu.memory_space<vmem>>, vector<1x8x128xf32>,
      %c1_i32_38 = arith.constant 1 : i32
      %67 = arith.addi %49, %c1_i32_38 : i32
      %68 = arith.index_cast %67 : i32 to index
      %c0_39 = arith.constant 0 : index
      %c0_40 = arith.constant 0 : index
      %69 = vector.load %arg7[%68, %c0_39, %c0_40] : memref<4x8x128xf32, #tpu.memory_space<vmem>>, vector<1x8x128xf32>
      %cst_41 = arith.constant 1.000000e+00 : f32
      %70 = arith.subf %cst_41, %54 : f32
      %71 = vector.broadcast %70 : f32 to vector<1x8x128xf32>
      %72 = arith.mulf %71, %69 : vector<1x8x128xf32>
      %73 = vector.broadcast %54 : f32 to vector<1x8x128xf32>
      %74 = arith.mulf %73, %56 : vector<1x8x128xf32>
      %75 = arith.addf %72, %74 : vector<1x8x128xf32>
      %c1_i32_42 = arith.constant 1 : i32
      %76 = arith.addi %49, %c1_i32_42 : i32
      %77 = arith.index_cast %76 : i32 to index
      %c0_43 = arith.constant 0 : index
      %c0_44 = arith.constant 0 : index
      %78 = vector.load %arg7[%77, %c0_43, %c0_44] : memref<4x8x128xf32, #tpu.memory_space<vmem>>, vector<1x8x128xf32>
      tpu.vector_store %arg7[%77, %c0_43, %c0_44], %75 {strides = array<i32>} : memref<4x8x128xf32, #tpu.memory_space<vmem>>, vector<1x8x128xf32>,
    } else {
    }
    %c7_i32 = arith.constant 7 : i32
    %c8_i32_22 = arith.constant 8 : i32
    %38 = arith.muli %arg1, %c8_i32_22 : i32
    %39 = arith.addi %38, %c7_i32 : i32
    %c2_i32_23 = arith.constant 2 : i32
    %40 = arith.cmpi slt, %39, %c2_i32_23 : i32
    %41 = arith.extui %40 : i1 to i32
    %c0_i32_24 = arith.constant 0 : i32
    %42 = arith.cmpi ne, %41, %c0_i32_24 : i32
    scf.if %42 {
      %46 = arith.index_cast %39 : i32 to index
      %47 = memref.load %arg2[%46] : memref<8xi32, #tpu.memory_space<smem>>
      %c0_i32_28 = arith.constant 0 : i32
      %c2_i32_29 = arith.constant 2 : i32
      %48 = arith.maxsi %c0_i32_28, %47 : i32
      %49 = arith.minsi %c2_i32_29, %48 : i32
      %50 = arith.index_cast %39 : i32 to index
      %51 = memref.load %arg3[%50] : memref<8xf32, #tpu.memory_space<smem>>
      %cst = arith.constant 1.000000e-01 : f32
      %52 = arith.mulf %51, %cst : f32
      %cst_30 = arith.constant 1.000000e+00 : f32
      %53 = arith.subf %cst_30, %51 : f32
      %cst_31 = arith.constant 1.000000e-01 : f32
      %54 = arith.mulf %53, %cst_31 : f32
      %55 = arith.index_cast %c7_i32 : i32 to index
      %c0 = arith.constant 0 : index
      %c0_32 = arith.constant 0 : index
      %56 = vector.load %arg4[%55, %c0, %c0_32] : memref<8x8x128xf32, #tpu.memory_space<vmem>>, vector<1x8x128xf32>
      %57 = arith.index_cast %49 : i32 to index
      %c0_33 = arith.constant 0 : index
      %c0_34 = arith.constant 0 : index
      %58 = vector.load %arg7[%57, %c0_33, %c0_34] : memref<4x8x128xf32, #tpu.memory_space<vmem>>, vector<1x8x128xf32>
      %cst_35 = arith.constant 1.000000e+00 : f32
      %59 = arith.subf %cst_35, %52 : f32
      %60 = vector.broadcast %59 : f32 to vector<1x8x128xf32>
      %61 = arith.mulf %60, %58 : vector<1x8x128xf32>
      %62 = vector.broadcast %52 : f32 to vector<1x8x128xf32>
      %63 = arith.mulf %62, %56 : vector<1x8x128xf32>
      %64 = arith.addf %61, %63 : vector<1x8x128xf32>
      %65 = arith.index_cast %49 : i32 to index
      %c0_36 = arith.constant 0 : index
      %c0_37 = arith.constant 0 : index
      %66 = vector.load %arg7[%65, %c0_36, %c0_37] : memref<4x8x128xf32, #tpu.memory_space<vmem>>, vector<1x8x128xf32>
      tpu.vector_store %arg7[%65, %c0_36, %c0_37], %64 {strides = array<i32>} : memref<4x8x128xf32, #tpu.memory_space<vmem>>, vector<1x8x128xf32>,
      %c1_i32_38 = arith.constant 1 : i32
      %67 = arith.addi %49, %c1_i32_38 : i32
      %68 = arith.index_cast %67 : i32 to index
      %c0_39 = arith.constant 0 : index
      %c0_40 = arith.constant 0 : index
      %69 = vector.load %arg7[%68, %c0_39, %c0_40] : memref<4x8x128xf32, #tpu.memory_space<vmem>>, vector<1x8x128xf32>
      %cst_41 = arith.constant 1.000000e+00 : f32
      %70 = arith.subf %cst_41, %54 : f32
      %71 = vector.broadcast %70 : f32 to vector<1x8x128xf32>
      %72 = arith.mulf %71, %69 : vector<1x8x128xf32>
      %73 = vector.broadcast %54 : f32 to vector<1x8x128xf32>
      %74 = arith.mulf %73, %56 : vector<1x8x128xf32>
      %75 = arith.addf %72, %74 : vector<1x8x128xf32>
      %c1_i32_42 = arith.constant 1 : i32
      %76 = arith.addi %49, %c1_i32_42 : i32
      %77 = arith.index_cast %76 : i32 to index
      %c0_43 = arith.constant 0 : index
      %c0_44 = arith.constant 0 : index
      %78 = vector.load %arg7[%77, %c0_43, %c0_44] : memref<4x8x128xf32, #tpu.memory_space<vmem>>, vector<1x8x128xf32>
      tpu.vector_store %arg7[%77, %c0_43, %c0_44], %75 {strides = array<i32>} : memref<4x8x128xf32, #tpu.memory_space<vmem>>, vector<1x8x128xf32>,
    } else {
    }
    %c8_i32_25 = arith.constant 8 : i32
    %c0_i32_26 = arith.constant 0 : i32
    %43 = arith.cmpi eq, %arg1, %c0_i32_26 : i32
    %44 = arith.extui %43 : i1 to i32
    %c0_i32_27 = arith.constant 0 : i32
    %45 = arith.cmpi ne, %44, %c0_i32_27 : i32
    scf.if %45 {
      %c0_i32_28 = arith.constant 0 : i32
      %c0_i32_29 = arith.constant 0 : i32
      %c0_i32_30 = arith.constant 0 : i32
      %46 = tpu.memref_slice %arg6[%arg0, %c0_i32_28, %c0_i32_29, %c0_i32_30] : memref<1x4x8x128xf32, #tpu.memory_space<any>> -> memref<1x4x8x128xf32, #tpu.memory_space<any>>
      %47 = tpu.memref_squeeze %46 : memref<1x4x8x128xf32, #tpu.memory_space<any>> -> memref<4x8x128xf32, #tpu.memory_space<any>>
      tpu.enqueue_dma source(%arg7 : memref<4x8x128xf32, #tpu.memory_space<vmem>>) target(%47 : memref<4x8x128xf32, #tpu.memory_space<any>>) target_semaphore(%arg8 : memref<!tpu.dma_semaphore, #tpu.memory_space<semaphore_mem>>)
      %c0_i32_31 = arith.constant 0 : i32
      %c0_i32_32 = arith.constant 0 : i32
      %c0_i32_33 = arith.constant 0 : i32
      %48 = tpu.memref_slice %arg6[%arg0, %c0_i32_31, %c0_i32_32, %c0_i32_33] : memref<1x4x8x128xf32, #tpu.memory_space<any>> -> memref<1x4x8x128xf32, #tpu.memory_space<any>>
      %49 = tpu.memref_squeeze %48 : memref<1x4x8x128xf32, #tpu.memory_space<any>> -> memref<4x8x128xf32, #tpu.memory_space<any>>
      tpu.wait_dma2 semaphore(%arg8 : memref<!tpu.dma_semaphore, #tpu.memory_space<semaphore_mem>>) src(%arg7 : memref<4x8x128xf32, #tpu.memory_space<vmem>>) dst(%49 : memref<4x8x128xf32, #tpu.memory_space<any>>)
    } else {
    }
    return
  }
  func.func @transform_0(%arg0: i32, %arg1: i32, %arg2: memref<8xi32, #tpu.memory_space<smem>>, %arg3: memref<8xf32, #tpu.memory_space<smem>>) -> (i32, i32, i32) {
    %c0_i32 = arith.constant 0 : i32
    %c0_i32_0 = arith.constant 0 : i32
    return %arg1, %arg0, %c0_i32 : i32, i32, i32
  }
}

</mosaic_0001>

<llo_original>
// kernel: tpu_custom_call.1
$region0: #{tpu_custom_call.1}
  #allocation0 [shape = 'u32[]', space=smem, size = 0x4, offset = 0x4, fixed_abs, tag = 'smem constant byte address 0x4 - core index']
  #allocation1 [shape = 'u32[72,128]{1,0:T(1,128)}', space=vmem, size = 0x9000, scoped, tag = 'internal scratch']
  #allocation2 [shape = 'f32[4,8,128]{2,1,0:T(8,128)}', space=vmem, size = 0x4000, scoped, tag = 'scratch operand']
  #allocation3 [shape = 's32[1]{0}', space=sflag, size = 0x4, scoped, tag = 'scratch operand']
  #allocation4 [shape = 's32[1]{0}', space=sflag, size = 0x4, scoped, tag = 'scoped memory for tpu_custom_call.1']
  #allocation5 [shape = 'u8[512]{0}', space=smem, size = 0x200, scoped, tag = 'prefetched SMEM operand 0']
  #allocation6 [shape = 'u8[512]{0}', space=smem, size = 0x200, scoped, tag = 'prefetched SMEM operand 1']
  #allocation9 [shape = 's32[]', space=sflag, size = 0x4, offset = 0, fixed_abs, tag = 'sflag constant byte address 0x0 - dummy sync flag']
  #allocation10 [shape = 's32[]', space=sflag, size = 0x4, offset = 0, fixed_abs, tag = 'sflag constant byte address 0x0 - dummy sync flag']
  #allocation11 [shape = 'u32[]', space=smem, size = 0x4, offset = 0x44, fixed_abs, tag = 'smem constant byte address 0x44 - assertion arg 0']
  #allocation12 [shape = 'u32[]', space=smem, size = 0x4, offset = 0x48, fixed_abs, tag = 'smem constant byte address 0x48 - assertion arg 1']
  #allocation13 [shape = 's32[]', space=sflag, size = 0x4, offset = 0, fixed_abs, tag = 'sflag constant byte address 0x0 - dummy sync flag']
  #allocation14 [shape = 's32[]', space=sflag, size = 0x4, offset = 0, fixed_abs, tag = 'sflag constant byte address 0x0 - dummy sync flag']
  %s0 = inlined_call_operand.hbm [shape: s32[8], index: 0, kind: input, shape index: {}]
  %s1 = inlined_call_operand.hbm [shape: f32[8], index: 1, kind: input, shape index: {}]
  %s2 = inlined_call_operand.hbm [shape: f32[8,8,128], index: 2, kind: input, shape index: {}]
  %s3 = inlined_call_operand.hbm [shape: f32[1,4,8,128], index: 3, kind: input, shape index: {}]
  %s4 = inlined_call_operand.hbm [shape: f32[1,4,8,128], index: 4, kind: output, shape index: {}]
  %s5 = sld [smem:[#allocation0]]
  $region58: #{tpu_custom_call.1} parent=0
    _
  %s7 = ssub.s32 1, %s5
  %s8 = scalar_select 0, %s7, %s5
  %s10 = sshll.u32 %s0, 4
  %s11 = int_to_ptr.hbm [resolvable:$true] %s10
  %13 = dma.hbm_to_smem %s11, 16, [#allocation5], [#allocation4]
  %s15 = sshll.u32 %s1, 4
  %s16 = int_to_ptr.hbm [resolvable:$true] %s15
  %18 = dma.hbm_to_smem %s16, 16, [#allocation6], [#allocation4]
  %20 = dma.done [#allocation4], 32
  %21 = sfence
  $region1: #{tpu_custom_call.1} parent=0
    #allocation7 [shape = 'u8[32768]{0}', space=vmem, size = 0x8000, scoped, tag = 'input window, operand 2, single buffered']
    #allocation8 [shape = 's32[1]{0}', space=sflag, size = 0x4, scoped, tag = 'scoped memory for tpu_custom_call.1']
    %22 = vsyncpa [#allocation8], 0
    // Predicated region
    $region2: #{tpu_custom_call.1} parent=1 // pred_check
      _
    $region3: #{tpu_custom_call.1} parent=1 // pred_check_branch
      %24 = sbr.rel (0) target = $region5
    $region4: #{tpu_custom_call.1} parent=1 // pred_region
      %26 = vsyncadd [#allocation8], 0
      %s27 = sshll.u32 %s2, 4
      %s28 = int_to_ptr.hbm [resolvable:$true] %s27
      %s29 = sshll.u32 [#allocation7], 4
      %s30 = int_to_ptr.vmem [resolvable:$true] %s29
      %35 = dma.hbm_to_vmem [thread:$0]  %s28, 1024, %s30, [#allocation8], 128, 128, 8
    $region5: #{tpu_custom_call.1} parent=1 // pred_fallthru
      _
    // Predicated region
    $region6: #{tpu_custom_call.1} parent=1 // pred_check
      _
    $region7: #{tpu_custom_call.1} parent=1 // pred_check_branch
      %37 = sbr.rel (0) target = $region9
    $region8: #{tpu_custom_call.1} parent=1 // pred_region
      %39 = dma.done [#allocation8], 1024
    $region9: #{tpu_custom_call.1} parent=1 // pred_fallthru
      _
    %p40 = scmp.eq.s32.totalorder 0, 0
    // Predicated region
    $region10: #{tpu_custom_call.1} parent=1 // pred_check
      %p41 = pneg %p40
    $region11: #{tpu_custom_call.1} parent=1 // pred_check_branch
      %43 = sbr.rel (%p41) target = $region13
    $region12: #{tpu_custom_call.1} parent=1 // pred_region
      %s44 = smul.u32 0, 32
      %s45 = scalar_lea.hbm %s3, %s44
      // Predicated region
      $region14: #{tpu_custom_call.1} parent=12 // pred_check
        _
      $region15: #{tpu_custom_call.1} parent=12 // pred_check_branch
        %47 = sbr.rel target = $region17
      $region16: #{tpu_custom_call.1} parent=12 // pred_region
        %48 = sst [smem:[#allocation11]] [#allocation10]
        %49 = sst [smem:[#allocation12]] [#allocation9]
      $region17: #{tpu_custom_call.1} parent=12 // pred_fallthru
        _
      %51 = shalt.err (0)
      %s53 = sshll.u32 %s45, 4
      %s54 = int_to_ptr.hbm [resolvable:$true] %s53
      %s55 = sshll.u32 [#allocation2], 4
      %s56 = int_to_ptr.vmem [resolvable:$true] %s55
      %58 = dma.hbm_to_vmem [thread:$0]  %s54, 512, %s56, [#allocation3]
      %s59 = smul.u32 4, 8
      %s60 = smul.u32 %s59, 1
      %s61 = sshll.u32 %s60, 4
      %62 = dma.done [#allocation3], %s61
    $region13: #{tpu_custom_call.1} parent=1 // pred_fallthru
      _
    %s63 = smul.u32 0, 8
    %p64 = scmp.lt.s32.totalorder %s63, 2
    // Predicated region
    $region18: #{tpu_custom_call.1} parent=1 // pred_check
      %p65 = pneg %p64
    $region19: #{tpu_custom_call.1} parent=1 // pred_check_branch
      %67 = sbr.rel (%p65) target = $region21
    $region20: #{tpu_custom_call.1} parent=1 // pred_region
      %s68 = sld [smem:[#allocation5 + %s63]]
      %p69 = scmp.gt.s32.totalorder %s68, 0
      %s70 = scalar_select %p69, %s68, 0
      %p71 = scmp.lt.s32.totalorder %s70, 2
      %s72 = scalar_select %p71, %s70, 2
      %s73 = sld [smem:[#allocation6 + %s63]]
      %s74 = smul.f32 %s73, 0.1
      %s75 = ssub.f32 1.0, %s73
      %s76 = smul.f32 %s75, 0.1
      %v77 = vld [vmem:[#allocation7] sm:$0xff]
      %s78 = smul.u32 %s72, 8
      %s79 = scalar_lea.vmem [#allocation2], %s78
      %v80 = vld [vmem:[%s79] sm:$0xff]
      %s81 = ssub.f32 1.0, %s74
      %v82 = vstv %s81
      %v83 = vmul.f32 %v82, %v80
      %v84 = vstv %s74
      %v85 = vmul.f32 %v84, %v77
      %v86 = vadd.f32 %v83, %v85
      %87 = vst [vmem:[%s79] sm:$0xff] %v86
      %s88 = sadd.s32 %s72, 1
      %s89 = smul.u32 %s88, 8
      %s90 = scalar_lea.vmem [#allocation2], %s89
      %v91 = vld [vmem:[%s90] sm:$0xff]
      %s92 = ssub.f32 1.0, %s76
      %v93 = vstv %s92
      %v94 = vmul.f32 %v93, %v91
      %v95 = vstv %s76
      %v96 = vmul.f32 %v95, %v77
      %v97 = vadd.f32 %v94, %v96
      %98 = vst [vmem:[%s90] sm:$0xff] %v97
    $region21: #{tpu_custom_call.1} parent=1 // pred_fallthru
      _
    %s99 = sadd.s32 %s63, 1
    %p100 = scmp.lt.s32.totalorder %s99, 2
    // Predicated region
    $region22: #{tpu_custom_call.1} parent=1 // pred_check
      %p101 = pneg %p100
    $region23: #{tpu_custom_call.1} parent=1 // pred_check_branch
      %103 = sbr.rel (%p101) target = $region25
    $region24: #{tpu_custom_call.1} parent=1 // pred_region
      %s104 = sld [smem:[#allocation5 + %s99]]
      %p105 = scmp.gt.s32.totalorder %s104, 0
      %s106 = scalar_select %p105, %s104, 0
      %p107 = scmp.lt.s32.totalorder %s106, 2
      %s108 = scalar_select %p107, %s106, 2
      %s109 = sld [smem:[#allocation6 + %s99]]
      %s110 = smul.f32 %s109, 0.1
      %s111 = ssub.f32 1.0, %s109
      %s112 = smul.f32 %s111, 0.1
      %s113 = scalar_lea.vmem [#allocation7], 8
      %v114 = vld [vmem:[%s113] sm:$0xff]
      %s115 = smul.u32 %s108, 8
      %s116 = scalar_lea.vmem [#allocation2], %s115
      %v117 = vld [vmem:[%s116] sm:$0xff]
      %s118 = ssub.f32 1.0, %s110
      %v119 = vstv %s118
      %v120 = vmul.f32 %v119, %v117
      %v121 = vstv %s110
      %v122 = vmul.f32 %v121, %v114
      %v123 = vadd.f32 %v120, %v122
      %124 = vst [vmem:[%s116] sm:$0xff] %v123
      %s125 = sadd.s32 %s108, 1
      %s126 = smul.u32 %s125, 8
      %s127 = scalar_lea.vmem [#allocation2], %s126
      %v128 = vld [vmem:[%s127] sm:$0xff]
      %s129 = ssub.f32 1.0, %s112
      %v130 = vstv %s129
      %v131 = vmul.f32 %v130, %v128
      %v132 = vstv %s112
      %v133 = vmul.f32 %v132, %v114
      %v134 = vadd.f32 %v131, %v133
      %135 = vst [vmem:[%s127] sm:$0xff] %v134
    $region25: #{tpu_custom_call.1} parent=1 // pred_fallthru
      _
    %s136 = sadd.s32 %s63, 2
    %p137 = scmp.lt.s32.totalorder %s136, 2
    // Predicated region
    $region26: #{tpu_custom_call.1} parent=1 // pred_check
      %p138 = pneg %p137
    $region27: #{tpu_custom_call.1} parent=1 // pred_check_branch
      %140 = sbr.rel (%p138) target = $region29
    $region28: #{tpu_custom_call.1} parent=1 // pred_region
      %s141 = sld [smem:[#allocation5 + %s136]]
      %p142 = scmp.gt.s32.totalorder %s141, 0
      %s143 = scalar_select %p142, %s141, 0
      %p144 = scmp.lt.s32.totalorder %s143, 2
      %s145 = scalar_select %p144, %s143, 2
      %s146 = sld [smem:[#allocation6 + %s136]]
      %s147 = smul.f32 %s146, 0.1
      %s148 = ssub.f32 1.0, %s146
      %s149 = smul.f32 %s148, 0.1
      %s150 = scalar_lea.vmem [#allocation7], 16
      %v151 = vld [vmem:[%s150] sm:$0xff]
      %s152 = smul.u32 %s145, 8
      %s153 = scalar_lea.vmem [#allocation2], %s152
      %v154 = vld [vmem:[%s153] sm:$0xff]
      %s155 = ssub.f32 1.0, %s147
      %v156 = vstv %s155
      %v157 = vmul.f32 %v156, %v154
      %v158 = vstv %s147
      %v159 = vmul.f32 %v158, %v151
      %v160 = vadd.f32 %v157, %v159
      %161 = vst [vmem:[%s153] sm:$0xff] %v160
      %s162 = sadd.s32 %s145, 1
      %s163 = smul.u32 %s162, 8
      %s164 = scalar_lea.vmem [#allocation2], %s163
      %v165 = vld [vmem:[%s164] sm:$0xff]
      %s166 = ssub.f32 1.0, %s149
      %v167 = vstv %s166
      %v168 = vmul.f32 %v167, %v165
      %v169 = vstv %s149
      %v170 = vmul.f32 %v169, %v151
      %v171 = vadd.f32 %v168, %v170
      %172 = vst [vmem:[%s164] sm:$0xff] %v171
    $region29: #{tpu_custom_call.1} parent=1 // pred_fallthru
      _
    %s173 = sadd.s32 %s63, 3
    %p174 = scmp.lt.s32.totalorder %s173, 2
    // Predicated region
    $region30: #{tpu_custom_call.1} parent=1 // pred_check
      %p175 = pneg %p174
    $region31: #{tpu_custom_call.1} parent=1 // pred_check_branch
      %177 = sbr.rel (%p175) target = $region33
    $region32: #{tpu_custom_call.1} parent=1 // pred_region
      %s178 = sld [smem:[#allocation5 + %s173]]
      %p179 = scmp.gt.s32.totalorder %s178, 0
      %s180 = scalar_select %p179, %s178, 0
      %p181 = scmp.lt.s32.totalorder %s180, 2
      %s182 = scalar_select %p181, %s180, 2
      %s183 = sld [smem:[#allocation6 + %s173]]
      %s184 = smul.f32 %s183, 0.1
      %s185 = ssub.f32 1.0, %s183
      %s186 = smul.f32 %s185, 0.1
      %s187 = scalar_lea.vmem [#allocation7], 24
      %v188 = vld [vmem:[%s187] sm:$0xff]
      %s189 = smul.u32 %s182, 8
      %s190 = scalar_lea.vmem [#allocation2], %s189
      %v191 = vld [vmem:[%s190] sm:$0xff]
      %s192 = ssub.f32 1.0, %s184
      %v193 = vstv %s192
      %v194 = vmul.f32 %v193, %v191
      %v195 = vstv %s184
      %v196 = vmul.f32 %v195, %v188
      %v197 = vadd.f32 %v194, %v196
      %198 = vst [vmem:[%s190] sm:$0xff] %v197
      %s199 = sadd.s32 %s182, 1
      %s200 = smul.u32 %s199, 8
      %s201 = scalar_lea.vmem [#allocation2], %s200
      %v202 = vld [vmem:[%s201] sm:$0xff]
      %s203 = ssub.f32 1.0, %s186
      %v204 = vstv %s203
      %v205 = vmul.f32 %v204, %v202
      %v206 = vstv %s186
      %v207 = vmul.f32 %v206, %v188
      %v208 = vadd.f32 %v205, %v207
      %209 = vst [vmem:[%s201] sm:$0xff] %v208
    $region33: #{tpu_custom_call.1} parent=1 // pred_fallthru
      _
    %s210 = sadd.s32 %s63, 4
    %p211 = scmp.lt.s32.totalorder %s210, 2
    // Predicated region
    $region34: #{tpu_custom_call.1} parent=1 // pred_check
      %p212 = pneg %p211
    $region35: #{tpu_custom_call.1} parent=1 // pred_check_branch
      %214 = sbr.rel (%p212) target = $region37
    $region36: #{tpu_custom_call.1} parent=1 // pred_region
      %s215 = sld [smem:[#allocation5 + %s210]]
      %p216 = scmp.gt.s32.totalorder %s215, 0
      %s217 = scalar_select %p216, %s215, 0
      %p218 = scmp.lt.s32.totalorder %s217, 2
      %s219 = scalar_select %p218, %s217, 2
      %s220 = sld [smem:[#allocation6 + %s210]]
      %s221 = smul.f32 %s220, 0.1
      %s222 = ssub.f32 1.0, %s220
      %s223 = smul.f32 %s222, 0.1
      %s224 = scalar_lea.vmem [#allocation7], 32
      %v225 = vld [vmem:[%s224] sm:$0xff]
      %s226 = smul.u32 %s219, 8
      %s227 = scalar_lea.vmem [#allocation2], %s226
      %v228 = vld [vmem:[%s227] sm:$0xff]
      %s229 = ssub.f32 1.0, %s221
      %v230 = vstv %s229
      %v231 = vmul.f32 %v230, %v228
      %v232 = vstv %s221
      %v233 = vmul.f32 %v232, %v225
      %v234 = vadd.f32 %v231, %v233
      %235 = vst [vmem:[%s227] sm:$0xff] %v234
      %s236 = sadd.s32 %s219, 1
      %s237 = smul.u32 %s236, 8
      %s238 = scalar_lea.vmem [#allocation2], %s237
      %v239 = vld [vmem:[%s238] sm:$0xff]
      %s240 = ssub.f32 1.0, %s223
      %v241 = vstv %s240
      %v242 = vmul.f32 %v241, %v239
      %v243 = vstv %s223
      %v244 = vmul.f32 %v243, %v225
      %v245 = vadd.f32 %v242, %v244
      %246 = vst [vmem:[%s238] sm:$0xff] %v245
    $region37: #{tpu_custom_call.1} parent=1 // pred_fallthru
      _
    %s247 = sadd.s32 %s63, 5
    %p248 = scmp.lt.s32.totalorder %s247, 2
    // Predicated region
    $region38: #{tpu_custom_call.1} parent=1 // pred_check
      %p249 = pneg %p248
    $region39: #{tpu_custom_call.1} parent=1 // pred_check_branch
      %251 = sbr.rel (%p249) target = $region41
    $region40: #{tpu_custom_call.1} parent=1 // pred_region
      %s252 = sld [smem:[#allocation5 + %s247]]
      %p253 = scmp.gt.s32.totalorder %s252, 0
      %s254 = scalar_select %p253, %s252, 0
      %p255 = scmp.lt.s32.totalorder %s254, 2
      %s256 = scalar_select %p255, %s254, 2
      %s257 = sld [smem:[#allocation6 + %s247]]
      %s258 = smul.f32 %s257, 0.1
      %s259 = ssub.f32 1.0, %s257
      %s260 = smul.f32 %s259, 0.1
      %s261 = scalar_lea.vmem [#allocation7], 40
      %v262 = vld [vmem:[%s261] sm:$0xff]
      %s263 = smul.u32 %s256, 8
      %s264 = scalar_lea.vmem [#allocation2], %s263
      %v265 = vld [vmem:[%s264] sm:$0xff]
      %s266 = ssub.f32 1.0, %s258
      %v267 = vstv %s266
      %v268 = vmul.f32 %v267, %v265
      %v269 = vstv %s258
      %v270 = vmul.f32 %v269, %v262
      %v271 = vadd.f32 %v268, %v270
      %272 = vst [vmem:[%s264] sm:$0xff] %v271
      %s273 = sadd.s32 %s256, 1
      %s274 = smul.u32 %s273, 8
      %s275 = scalar_lea.vmem [#allocation2], %s274
      %v276 = vld [vmem:[%s275] sm:$0xff]
      %s277 = ssub.f32 1.0, %s260
      %v278 = vstv %s277
      %v279 = vmul.f32 %v278, %v276
      %v280 = vstv %s260
      %v281 = vmul.f32 %v280, %v262
      %v282 = vadd.f32 %v279, %v281
      %283 = vst [vmem:[%s275] sm:$0xff] %v282
    $region41: #{tpu_custom_call.1} parent=1 // pred_fallthru
      _
    %s284 = sadd.s32 %s63, 6
    %p285 = scmp.lt.s32.totalorder %s284, 2
    // Predicated region
    $region42: #{tpu_custom_call.1} parent=1 // pred_check
      %p286 = pneg %p285
    $region43: #{tpu_custom_call.1} parent=1 // pred_check_branch
      %288 = sbr.rel (%p286) target = $region45
    $region44: #{tpu_custom_call.1} parent=1 // pred_region
      %s289 = sld [smem:[#allocation5 + %s284]]
      %p290 = scmp.gt.s32.totalorder %s289, 0
      %s291 = scalar_select %p290, %s289, 0
      %p292 = scmp.lt.s32.totalorder %s291, 2
      %s293 = scalar_select %p292, %s291, 2
      %s294 = sld [smem:[#allocation6 + %s284]]
      %s295 = smul.f32 %s294, 0.1
      %s296 = ssub.f32 1.0, %s294
      %s297 = smul.f32 %s296, 0.1
      %s298 = scalar_lea.vmem [#allocation7], 48
      %v299 = vld [vmem:[%s298] sm:$0xff]
      %s300 = smul.u32 %s293, 8
      %s301 = scalar_lea.vmem [#allocation2], %s300
      %v302 = vld [vmem:[%s301] sm:$0xff]
      %s303 = ssub.f32 1.0, %s295
      %v304 = vstv %s303
      %v305 = vmul.f32 %v304, %v302
      %v306 = vstv %s295
      %v307 = vmul.f32 %v306, %v299
      %v308 = vadd.f32 %v305, %v307
      %309 = vst [vmem:[%s301] sm:$0xff] %v308
      %s310 = sadd.s32 %s293, 1
      %s311 = smul.u32 %s310, 8
      %s312 = scalar_lea.vmem [#allocation2], %s311
      %v313 = vld [vmem:[%s312] sm:$0xff]
      %s314 = ssub.f32 1.0, %s297
      %v315 = vstv %s314
      %v316 = vmul.f32 %v315, %v313
      %v317 = vstv %s297
      %v318 = vmul.f32 %v317, %v299
      %v319 = vadd.f32 %v316, %v318
      %320 = vst [vmem:[%s312] sm:$0xff] %v319
    $region45: #{tpu_custom_call.1} parent=1 // pred_fallthru
      _
    %s321 = sadd.s32 %s63, 7
    %p322 = scmp.lt.s32.totalorder %s321, 2
    // Predicated region
    $region46: #{tpu_custom_call.1} parent=1 // pred_check
      %p323 = pneg %p322
    $region47: #{tpu_custom_call.1} parent=1 // pred_check_branch
      %325 = sbr.rel (%p323) target = $region49
    $region48: #{tpu_custom_call.1} parent=1 // pred_region
      %s326 = sld [smem:[#allocation5 + %s321]]
      %p327 = scmp.gt.s32.totalorder %s326, 0
      %s328 = scalar_select %p327, %s326, 0
      %p329 = scmp.lt.s32.totalorder %s328, 2
      %s330 = scalar_select %p329, %s328, 2
      %s331 = sld [smem:[#allocation6 + %s321]]
      %s332 = smul.f32 %s331, 0.1
      %s333 = ssub.f32 1.0, %s331
      %s334 = smul.f32 %s333, 0.1
      %s335 = scalar_lea.vmem [#allocation7], 56
      %v336 = vld [vmem:[%s335] sm:$0xff]
      %s337 = smul.u32 %s330, 8
      %s338 = scalar_lea.vmem [#allocation2], %s337
      %v339 = vld [vmem:[%s338] sm:$0xff]
      %s340 = ssub.f32 1.0, %s332
      %v341 = vstv %s340
      %v342 = vmul.f32 %v341, %v339
      %v343 = vstv %s332
      %v344 = vmul.f32 %v343, %v336
      %v345 = vadd.f32 %v342, %v344
      %346 = vst [vmem:[%s338] sm:$0xff] %v345
      %s347 = sadd.s32 %s330, 1
      %s348 = smul.u32 %s347, 8
      %s349 = scalar_lea.vmem [#allocation2], %s348
      %v350 = vld [vmem:[%s349] sm:$0xff]
      %s351 = ssub.f32 1.0, %s334
      %v352 = vstv %s351
      %v353 = vmul.f32 %v352, %v350
      %v354 = vstv %s334
      %v355 = vmul.f32 %v354, %v336
      %v356 = vadd.f32 %v353, %v355
      %357 = vst [vmem:[%s349] sm:$0xff] %v356
    $region49: #{tpu_custom_call.1} parent=1 // pred_fallthru
      _
    // Predicated region
    $region50: #{tpu_custom_call.1} parent=1 // pred_check
      %p358 = pneg %p40
    $region51: #{tpu_custom_call.1} parent=1 // pred_check_branch
      %360 = sbr.rel (%p358) target = $region53
    $region52: #{tpu_custom_call.1} parent=1 // pred_region
      %s361 = smul.u32 0, 32
      %s362 = scalar_lea.hbm %s4, %s361
      // Predicated region
      $region54: #{tpu_custom_call.1} parent=52 // pred_check
        _
      $region55: #{tpu_custom_call.1} parent=52 // pred_check_branch
        %364 = sbr.rel target = $region57
      $region56: #{tpu_custom_call.1} parent=52 // pred_region
        %365 = sst [smem:[#allocation11]] [#allocation14]
        %366 = sst [smem:[#allocation12]] [#allocation13]
      $region57: #{tpu_custom_call.1} parent=52 // pred_fallthru
        _
      %368 = shalt.err (0)
      %s370 = sshll.u32 [#allocation2], 4
      %s371 = int_to_ptr.vmem [resolvable:$true] %s370
      %s372 = sshll.u32 %s362, 4
      %s373 = int_to_ptr.hbm [resolvable:$true] %s372
      %375 = dma.vmem_to_hbm [thread:$0]  %s371, 512, %s373, [#allocation3]
      %s376 = smul.u32 4, 8
      %s377 = smul.u32 %s376, 1
      %s378 = sshll.u32 %s377, 4
      %379 = dma.done [#allocation3], %s378
    $region53: #{tpu_custom_call.1} parent=1 // pred_fallthru
      _
    %380 = vsyncpa [#allocation8], 1
  %381 = vsyncmov [#allocation3]
  %s382 = vpop.sfrf %381
  %p383 = scmp.eq.s32.totalorder %s382, 0
  %p384 = pneg %p383
  %386 = shalt.err (%p384)

</llo_original>
